<compile_context>
chip_gen: v7x
topology: tpu7x:2x2x1
jax: 0.10.0
libtpu: 0.0.40
codegen_flags: <defaults>
</compile_context>

<pallas_src>
import jax
import jax.numpy as jnp
from jax.experimental import pallas as pl
from jax.experimental.pallas import tpu as pltpu


def _round_up(x: int, m: int) -> int:
    return (x + m - 1) // m * m


def _rel_predictor_kernel(x_ref, w_ref, b_ref, o_ref):
    # In-kernel bf16 cast of the f32 x tile (VPU, free vs the DMA), bf16 MXU
    # matmul with f32 accumulation, f32 bias add + sigmoid, cast only at store.
    x_bf16 = x_ref[...].astype(jnp.bfloat16)
    logits = jnp.dot(x_bf16, w_ref[...], preferred_element_type=jnp.float32)
    logits = logits + b_ref[...]                    # broadcast (1, C_out) over rows
    o_ref[...] = jax.nn.sigmoid(logits).astype(o_ref.dtype)


def _pick_tile(n: int, c_in: int, c_out: int) -> int:
    """Row-tile size: ~1 MiB of x per step, >=4 grid steps, <=~8 MiB of buffers."""
    # ~1 MiB of f32 x per grid step so per-step overhead (~0.35 us) is amortized.
    tm_bw = _round_up(max(1, (1 << 20) // max(1, 4 * c_in)), 8)
    # At least ~4 grid steps: pipeline depth + both v7x TensorCores stay busy.
    tm_steps = _round_up(pl.cdiv(n, 4), 8)
    # Double-buffered x (f32) + out tiles must stay under ~8 MiB (safe on v5e's
    # 16 MiB scoped default and v7x's 32 MiB scoped / 64 MiB physical VMEM).
    buf_budget = 8 << 20
    tm_vmem = max(8, (buf_budget // (2 * 4 * (c_in + c_out))) // 8 * 8)
    return max(8, min(tm_bw, tm_steps, tm_vmem))


def relation_predictor(reloi_feats, weight_t, bias, *, tm=None,
                       out_dtype=jnp.float32):
    """Linear -> sigmoid.

    reloi_feats: [N, C_in] f32, weight_t: [C_in, C_out] f32 (PyTorch weight.T),
    bias: [C_out] f32. Returns [N, C_out] = sigmoid(x @ W^T + b).
    """
    n, c_in = reloi_feats.shape
    c_out = weight_t.shape[1]

    # x streams as-is (f32, no wrapper copy). Weight/bias are tiny & VMEM-resident;
    # cast once here (do it at parameter-load time if weights are static).
    w = weight_t.astype(jnp.bfloat16)
    b2d = bias.reshape(1, c_out).astype(jnp.float32)

    if tm is None:
        tm = _pick_tile(n, c_in, c_out)
    tm = max(8, _round_up(tm, 8))
    grid = (pl.cdiv(n, tm),)        # ragged last tile handled by Pallas masking

    out_itemsize = jnp.dtype(out_dtype).itemsize

    return pl.pallas_call(
        _rel_predictor_kernel,
        out_shape=jax.ShapeDtypeStruct((n, c_out), out_dtype),
        grid_spec=pltpu.PrefetchScalarGridSpec(
            num_scalar_prefetch=0,
            grid=grid,
            in_specs=[
                # x streams tile-by-tile (double-buffered by the Pallas pipeline).
                pl.BlockSpec((tm, c_in), lambda i: (i, 0)),
                # Weight and bias stay resident in VMEM across all grid steps.
                pl.BlockSpec((c_in, c_out), lambda i: (0, 0)),
                pl.BlockSpec((1, c_out), lambda i: (0, 0)),
            ],
            out_specs=pl.BlockSpec((tm, c_out), lambda i: (i, 0)),
        ),
        compiler_params=pltpu.CompilerParams(
            # Row tiles are independent -> shard across TensorCores on v7x.
            dimension_semantics=("parallel",),
        ),
        # Advisory: accurate, memory-bound footprint so XLA overlaps neighbors.
        cost_estimate=pl.CostEstimate(
            flops=2 * n * c_in * c_out,
            transcendentals=n * c_out,
            bytes_accessed=4 * n * c_in            # x read (f32, streamed once)
            + 2 * c_in * c_out                     # weight (bf16, resident)
            + 4 * c_out                            # bias (f32)
            + out_itemsize * n * c_out,            # output write
        ),
    )(reloi_feats, w, b2d)


if __name__ == "__main__":
    key = jax.random.PRNGKey(0)
    k_x, k_w = jax.random.split(key)

    # Small shapes consistent with the module's forward: [num_rois, in_channels].
    # N chosen non-multiple of 8 and of the tile to exercise the ragged last block.
    N, C_IN, C_OUT = 100, 32, 16

    reloi_feats = jax.random.normal(k_x, (N, C_IN), dtype=jnp.float32)

    # Deterministic param init matching nn.init: weight ~ N(0, 0.01), bias = 0.
    # PyTorch weight is [C_OUT, C_IN]; we store its transpose [C_IN, C_OUT].
    weight = 0.01 * jax.random.normal(k_w, (C_OUT, C_IN), dtype=jnp.float32)
    weight_t = weight.T
    bias = jnp.zeros((C_OUT,), dtype=jnp.float32)

    # Auto tile selection -> tm=32 here, giving a 4-step grid with a partial tail.
    out = relation_predictor(reloi_feats, weight_t, bias)
    jax.block_until_ready(out)

    # Pure-JAX f32 reference check (kernel uses bf16 matmul -> loose tolerance).
    ref = jax.nn.sigmoid(reloi_feats @ weight_t + bias)
    assert out.shape == (N, C_OUT)
    assert out.dtype == jnp.float32
    assert jnp.allclose(out, ref, atol=1e-2, rtol=1e-2), float(
        jnp.max(jnp.abs(out - ref))
    )

    print("KERNEL_OK")
</pallas_src>

<mosaic_0001>
module attributes {stable_mosaic.version = 11 : i64} {
  func.func @_rel_predictor_kernel(%arg0: i32, %arg1: memref<32x32xf32, #tpu.memory_space<vmem>>, %arg2: memref<32x16xbf16, #tpu.memory_space<vmem>>, %arg3: memref<1x16xf32, #tpu.memory_space<vmem>>, %arg4: memref<32x16xf32, #tpu.memory_space<vmem>>) attributes {dimension_semantics = [#tpu.dimension_semantics<parallel>], iteration_bounds = array<i64: 4>, scalar_prefetch = 0 : i64, scratch_operands = 0 : i64, tpu.core_type = #tpu.core_type<tc>, window_params = [{transform_indices = @transform_0, window_bounds = array<i64: 32, 32>}, {pipeline_mode = #tpu.pipeline_mode<synchronous>, transform_indices = @transform_1, window_bounds = array<i64: 32, 16>}, {pipeline_mode = #tpu.pipeline_mode<synchronous>, transform_indices = @transform_2, window_bounds = array<i64: 1, 16>}, {transform_indices = @transform_3, window_bounds = array<i64: 32, 16>}]} {
    %c0 = arith.constant 0 : index
    %c0_0 = arith.constant 0 : index
    %0 = vector.load %arg1[%c0, %c0_0] : memref<32x32xf32, #tpu.memory_space<vmem>>, vector<32x32xf32>
    %1 = arith.truncf %0 : vector<32x32xf32> to vector<32x32xbf16>
    %c0_1 = arith.constant 0 : index
    %c0_2 = arith.constant 0 : index
    %2 = vector.load %arg2[%c0_1, %c0_2] : memref<32x16xbf16, #tpu.memory_space<vmem>>, vector<32x16xbf16>
    %cst = arith.constant dense<0.000000e+00> : vector<32x16xf32>
    %3 = tpu.matmul %1, %2, %cst {dimension_numbers = #tpu.dot_dimension_numbers<[1], [0], [0], [1], [0, 0, 1, 1], [], []>} : vector<32x32xbf16>, vector<32x16xbf16>, vector<32x16xf32> -> vector<32x16xf32>
    %c0_3 = arith.constant 0 : index
    %c0_4 = arith.constant 0 : index
    %4 = vector.load %arg3[%c0_3, %c0_4] : memref<1x16xf32, #tpu.memory_space<vmem>>, vector<1x16xf32>
    %5 = vector.broadcast %4 : vector<1x16xf32> to vector<32x16xf32>
    %6 = arith.addf %3, %5 : vector<32x16xf32>
    %7 = arith.negf %6 : vector<32x16xf32>
    %8 = math.exp %7 : vector<32x16xf32>
    %cst_5 = arith.constant 1.000000e+00 : f32
    %9 = vector.broadcast %cst_5 : f32 to vector<32x16xf32>
    %10 = arith.addf %9, %8 : vector<32x16xf32>
    %11 = arith.divf %9, %10 : vector<32x16xf32>
    %c0_6 = arith.constant 0 : index
    %c0_7 = arith.constant 0 : index
    %12 = vector.load %arg4[%c0_6, %c0_7] : memref<32x16xf32, #tpu.memory_space<vmem>>, vector<32x16xf32>
    tpu.vector_store %arg4[%c0_6, %c0_7], %11 {strides = array<i32>} : memref<32x16xf32, #tpu.memory_space<vmem>>, vector<32x16xf32>,
    return
  }
  func.func @transform_0(%arg0: i32) -> (i32, i32) {
    %c0_i32 = arith.constant 0 : i32
    %c0_i32_0 = arith.constant 0 : i32
    return %arg0, %c0_i32 : i32, i32
  }
  func.func @transform_1(%arg0: i32) -> (i32, i32) {
    %c0_i32 = arith.constant 0 : i32
    %c0_i32_0 = arith.constant 0 : i32
    %c0_i32_1 = arith.constant 0 : i32
    return %c0_i32, %c0_i32_0 : i32, i32
  }
  func.func @transform_2(%arg0: i32) -> (i32, i32) {
    %c0_i32 = arith.constant 0 : i32
    %c0_i32_0 = arith.constant 0 : i32
    %c0_i32_1 = arith.constant 0 : i32
    return %c0_i32, %c0_i32_0 : i32, i32
  }
  func.func @transform_3(%arg0: i32) -> (i32, i32) {
    %c0_i32 = arith.constant 0 : i32
    %c0_i32_0 = arith.constant 0 : i32
    return %arg0, %c0_i32 : i32, i32
  }
}

</mosaic_0001>

<llo_original>
// kernel: tpu_custom_call.1
$region0: #{tpu_custom_call.1}
  #allocation0 [shape = 'u32[]', space=smem, size = 0x4, offset = 0x4, fixed_abs, tag = 'smem constant byte address 0x4 - core index']
  #allocation1 [shape = 'u32[144,128]{1,0:T(1,128)}', space=vmem, size = 0x12000, scoped, tag = 'internal scratch']
  %s0 = inlined_call_operand.vmem [shape: f32[100,32], index: 0, kind: input, shape index: {}]
  %s1 = inlined_call_operand.vmem [shape: bf16[32,16], index: 1, kind: input, shape index: {}]
  %s2 = inlined_call_operand.vmem [shape: f32[1,16], index: 2, kind: input, shape index: {}]
  %s3 = inlined_call_operand.vmem [shape: f32[100,16], index: 3, kind: output, shape index: {}]
  %s4 = sld [smem:[#allocation0]]
  $region93: #{tpu_custom_call.1} parent=0
    _
  %s6 = ssub.s32 1, %s4
  %s7 = scalar_select 0, %s6, %s4
  $region1: #{tpu_custom_call.1} parent=0
    #allocation2 [shape = 'u8[32768]{0}', space=vmem, size = 0x8000, scoped, tag = 'output window, operand 0']
    loop: start=0, step=1, limit=6
    $region2: #{tpu_custom_call.1} parent=1 // loop_pre_header
      _
    $region3: #{tpu_custom_call.1} parent=1 // loop_header
      %s9 = sphi 0, %s13
      %p10 = scmp.ge.s32.totalorder %s9, 6
      %s19 = sphi 0, %s21
      %s22 = sphi 0, %s19
      %s23 = sphi 0, %s22
      %s39 = sphi 0, %s23
      %s43 = sphi 0, %s43
      %s45 = sphi 0, %s43
      %s46 = sphi 0, %s45
      %s60 = sphi 0, %s46
      %s64 = sphi 0, %s64
      %s66 = sphi 0, %s64
      %s67 = sphi 0, %s66
      %s81 = sphi 0, %s67
      %s87 = sphi 0, %s89
      %s90 = sphi 0, %s87
      %s91 = sphi 0, %s90
      %s107 = sphi 0, %s91
    $region4: #{tpu_custom_call.1} parent=1 // loop_header_branch
      %12 = sbr.rel (%p10) target = $region8
    $region5: #{tpu_custom_call.1} parent=1 // loop_body
      %s14 = ssub.s32 %s9, 1
      %s15 = ssub.s32 %s9, 2
      %s16 = sadd.s32 %s9, 1
      %s17 = ssub.s32 %s9, %s16
      %p18 = scmp.eq.s32.totalorder %s17, 0
      %s20 = sadd.s32 %s19, 1
      %s21 = scalar_select %p18, %s19, %s20
      %p24 = pneg %p18
      %p25 = scmp.eq.s32.totalorder %s9, 3
      %p26 = por %p24, %p25
      %p27 = scmp.ne.s32.totalorder %s19, %s22
      %p28 = scmp.eq.s32.totalorder %s9, 0
      %p29 = por %p27, %p28
      %p30 = scmp.ne.s32.totalorder %s19, %s22
      %p31 = scmp.eq.s32.totalorder %s14, 3
      %p32 = por %p30, %p31
      %p33 = scmp.ne.s32.totalorder %s22, %s23
      %p34 = scmp.eq.s32.totalorder %s14, 0
      %p35 = por %p33, %p34
      %p36 = scmp.ne.s32.totalorder %s22, %s23
      %p37 = scmp.eq.s32.totalorder %s15, 3
      %p38 = por %p36, %p37
      %p40 = scmp.ne.s32.totalorder %s23, %s39
      %p41 = scmp.eq.s32.totalorder %s15, 0
      %p42 = por %p40, %p41
      %s44 = sadd.s32 %s43, 1
      %p47 = scmp.eq.s32.totalorder %s9, 3
      %p48 = scmp.ne.s32.totalorder %s43, %s45
      %p49 = scmp.eq.s32.totalorder %s9, 0
      %p50 = por %p48, %p49
      %p51 = scmp.ne.s32.totalorder %s43, %s45
      %p52 = scmp.eq.s32.totalorder %s14, 3
      %p53 = por %p51, %p52
      %p54 = scmp.ne.s32.totalorder %s45, %s46
      %p55 = scmp.eq.s32.totalorder %s14, 0
      %p56 = por %p54, %p55
      %p57 = scmp.ne.s32.totalorder %s45, %s46
      %p58 = scmp.eq.s32.totalorder %s15, 3
      %p59 = por %p57, %p58
      %p61 = scmp.ne.s32.totalorder %s46, %s60
      %p62 = scmp.eq.s32.totalorder %s15, 0
      %p63 = por %p61, %p62
      %s65 = sadd.s32 %s64, 1
      %p68 = scmp.eq.s32.totalorder %s9, 3
      %p69 = scmp.ne.s32.totalorder %s64, %s66
      %p70 = scmp.eq.s32.totalorder %s9, 0
      %p71 = por %p69, %p70
      %p72 = scmp.ne.s32.totalorder %s64, %s66
      %p73 = scmp.eq.s32.totalorder %s14, 3
      %p74 = por %p72, %p73
      %p75 = scmp.ne.s32.totalorder %s66, %s67
      %p76 = scmp.eq.s32.totalorder %s14, 0
      %p77 = por %p75, %p76
      %p78 = scmp.ne.s32.totalorder %s66, %s67
      %p79 = scmp.eq.s32.totalorder %s15, 3
      %p80 = por %p78, %p79
      %p82 = scmp.ne.s32.totalorder %s67, %s81
      %p83 = scmp.eq.s32.totalorder %s15, 0
      %p84 = por %p82, %p83
      %s85 = ssub.s32 %s9, %s16
      %p86 = scmp.eq.s32.totalorder %s85, 0
      %s88 = sadd.s32 %s87, 1
      %s89 = scalar_select %p86, %s87, %s88
      %p92 = pneg %p86
      %p93 = scmp.eq.s32.totalorder %s9, 3
      %p94 = por %p92, %p93
      %p95 = scmp.ne.s32.totalorder %s87, %s90
      %p96 = scmp.eq.s32.totalorder %s9, 0
      %p97 = por %p95, %p96
      %p98 = scmp.ne.s32.totalorder %s87, %s90
      %p99 = scmp.eq.s32.totalorder %s14, 3
      %p100 = por %p98, %p99
      %p101 = scmp.ne.s32.totalorder %s90, %s91
      %p102 = scmp.eq.s32.totalorder %s14, 0
      %p103 = por %p101, %p102
      %p104 = scmp.ne.s32.totalorder %s90, %s91
      %p105 = scmp.eq.s32.totalorder %s15, 3
      %p106 = por %p104, %p105
      %p108 = scmp.ne.s32.totalorder %s91, %s107
      %p109 = scmp.eq.s32.totalorder %s15, 0
      %p110 = por %p108, %p109
      %p111 = scmp.le.s32.totalorder 1, %s9
      %p112 = scmp.lt.s32.totalorder %s9, 5
      %p113 = pnand %p111, %p112
      %p114 = pneg %p113
      // Predicated region
      $region9: #{tpu_custom_call.1} parent=5 // pred_check
        _
      $region10: #{tpu_custom_call.1} parent=5 // pred_check_branch
        %116 = sbr.rel (%p113) target = $region12
      $region11: #{tpu_custom_call.1} parent=5 // pred_region
        %s117 = ssub.s32 %s9, 1
        // Predicated region
        $region13: #{tpu_custom_call.1} parent=11 // pred_check
          %p118 = pneg %p56
        $region14: #{tpu_custom_call.1} parent=11 // pred_check_branch
          %120 = sbr.rel (%p118) target = $region16
        $region15: #{tpu_custom_call.1} parent=11 // pred_region
          _
        $region16: #{tpu_custom_call.1} parent=11 // pred_fallthru
          _
        // Predicated region
        $region17: #{tpu_custom_call.1} parent=11 // pred_check
          %p121 = pneg %p77
        $region18: #{tpu_custom_call.1} parent=11 // pred_check_branch
          %123 = sbr.rel (%p121) target = $region20
        $region19: #{tpu_custom_call.1} parent=11 // pred_region
          _
        $region20: #{tpu_custom_call.1} parent=11 // pred_fallthru
          _
      $region12: #{tpu_custom_call.1} parent=5 // pred_fallthru
        _
      %p124 = scmp.lt.s32.totalorder %s9, 4
      // Predicated region
      $region21: #{tpu_custom_call.1} parent=5 // pred_check
        %p125 = pneg %p124
      $region22: #{tpu_custom_call.1} parent=5 // pred_check_branch
        %127 = sbr.rel (%p125) target = $region24
      $region23: #{tpu_custom_call.1} parent=5 // pred_region
        // Predicated region
        $region25: #{tpu_custom_call.1} parent=23 // pred_check
          %p128 = pneg %p29
        $region26: #{tpu_custom_call.1} parent=23 // pred_check_branch
          %130 = sbr.rel (%p128) target = $region28
        $region27: #{tpu_custom_call.1} parent=23 // pred_region
          %s131 = smul.u32 4, %s9
          %s132 = ssub.s32 13, %s131
          %p133 = scmp.lt.s32.totalorder %s132, 4
          %s134 = scalar_select %p133, %s132, 4
          %s135 = smul.u32 128, %s134
          %p136 = scmp.lt.s32.totalorder %s131, 12
          %s137 = scalar_select %p136, %s131, 12
          %s138 = smul.addr %s137, 8
          %s139 = scalar_lea.vmem %s0, %s138
          %s140 = smul.u32 4, %s9
          %s141 = ssub.s32 13, %s140
          %p142 = scmp.lt.s32.totalorder %s141, 4
          %s143 = scalar_select %p142, %s141, 4
          %s144 = smul.u32 128, %s143
        $region28: #{tpu_custom_call.1} parent=23 // pred_fallthru
          _
      $region24: #{tpu_custom_call.1} parent=5 // pred_fallthru
        _
      %p145 = scmp.le.s32.totalorder 1, %s9
      %p146 = scmp.lt.s32.totalorder %s9, 5
      %p147 = pnand %p145, %p146
      %p148 = pneg %p147
      // Predicated region
      $region29: #{tpu_custom_call.1} parent=5 // pred_check
        _
      $region30: #{tpu_custom_call.1} parent=5 // pred_check_branch
        %150 = sbr.rel (%p147) target = $region32
      $region31: #{tpu_custom_call.1} parent=5 // pred_region
        %s151 = ssub.s32 %s9, 1
        %s152 = smul.u32 4, %s14
        %s153 = ssub.s32 13, %s152
        %p154 = scmp.lt.s32.totalorder %s153, 4
        %s155 = scalar_select %p154, %s153, 4
        %s156 = smul.u32 128, %s155
        %p157 = scmp.lt.s32.totalorder %s152, 12
        %s158 = scalar_select %p157, %s152, 12
        %s159 = smul.addr %s158, 8
        %s160 = scalar_lea.vmem %s0, %s159
        %p161 = pneg %p35
        %p162 = pneg %p32
        %p163 = pneg %p56
        %p164 = pneg %p53
        %p165 = pneg %p77
        %p166 = pneg %p74
        %p167 = pneg %p103
        %p168 = pneg %p100
        %s169 = sand.u32 %s90, 1
        %s170 = sand.u32 %s90, 1
        %s171 = smul.addr %s170, 32
        %s172 = scalar_lea.vmem [#allocation2], %s171
        %s173 = smul.u32 4, %s14
        %s174 = ssub.s32 13, %s173
        %p175 = scmp.lt.s32.totalorder %s174, 4
        %s176 = scalar_select %p175, %s174, 4
        %s177 = smul.u32 128, %s176
        %p178 = scmp.lt.s32.totalorder %s173, 12
        %s179 = scalar_select %p178, %s173, 12
        %s180 = smul.addr %s179, 8
        %s181 = scalar_lea.vmem %s0, %s180
        %s182 = smul.u32 4, %s14
        %s183 = ssub.s32 13, %s182
        %p184 = scmp.lt.s32.totalorder %s183, 4
        %s185 = scalar_select %p184, %s183, 4
        %s186 = smul.u32 128, %s185
        %s187 = smul.u32 4, %s14
        %s188 = ssub.s32 13, %s187
        %p189 = scmp.lt.s32.totalorder %s188, 4
        %s190 = scalar_select %p189, %s188, 4
        %s191 = smul.u32 128, %s190
        %v193 = vld [vmem:[%s181] sm:$0xff]
        %v194 = vld [vmem:[%s181 + $0x8] sm:$0xff]
        %v195 = vld [vmem:[%s181 + $0x10] sm:$0xff]
        %v196 = vld [vmem:[%s181 + $0x18] sm:$0xff]
        %v197 = vpack.c.bf16 %v194, %v193
        %v198 = vpack.c.bf16 %v196, %v195
        %v199 = vld [vmem:[%s1] sm:$0xf]
        %v200 = vld [vmem:[%s1 + $0x4] sm:$0xf]
        %v201 = vld [vmem:[%s1 + $0x8] sm:$0xf]
        %v202 = vld [vmem:[%s1 + $0xc] sm:$0xf]
        %v203 = vld [vmem:[%s2] sm:$0x1]
        %v205 = vlaneseq
        %v206 = vshrl.u32 %v205, 7
        %v207 = vsub.s32 0, %v206
        %v208 = vrot.slane %v203, %v207
        %v214 = vunpack.c.l.b16 %v199
        %v215 = vunpack.c.l.b16 %v200
        %v216 = vunpack.c.l.b16 %v201
        %v217 = vunpack.c.l.b16 %v202
        %v218 = vpack.c.b16 %v215, %v214
        %v219 = vpack.c.b16 %v217, %v216
        %vm222 = vcmask 261120
        %v224 = vsel %vm222, %v197, 0
        %v227 = vsel %vm222, %v198, 0
        %229 = vmatprep.subr.bf16.mxu0 0
        %230 = vmatpush1.bf16.msra.mxu0 %v218
        %231 = vmatprep.subr.bf16.mxu0 0
        %232 = vmatpush1.bf16.msra.mxu0 %v219
        %233 = vmatprep.subr.bf16.mxu0 0
        %234 = vmatpush1.bf16.msra.mxu0 0
        %235 = vmatprep.subr.bf16.mxu0 0
        %236 = vmatpush1.bf16.msra.mxu0 0
        %237 = vmatprep.subr.bf16.mxu0 0
        %238 = vmatpush1.bf16.msra.mxu0 0
        %239 = vmatprep.subr.bf16.mxu0 0
        %240 = vmatpush1.bf16.msra.mxu0 0
        %241 = vmatprep.subr.bf16.mxu0 0
        %242 = vmatpush1.bf16.msra.mxu0 0
        %243 = vmatprep.subr.bf16.mxu0 0
        %244 = vmatpush1.bf16.msra.mxu0 0
        %245 = vmatprep.subr.bf16.mxu0 0
        %246 = vmatpush1.bf16.msra.mxu0 0
        %247 = vmatprep.subr.bf16.mxu0 0
        %248 = vmatpush1.bf16.msra.mxu0 0
        %249 = vmatprep.subr.bf16.mxu0 0
        %250 = vmatpush1.bf16.msra.mxu0 0
        %251 = vmatprep.subr.bf16.mxu0 0
        %252 = vmatpush1.bf16.msra.mxu0 0
        %253 = vmatprep.subr.bf16.mxu0 0
        %254 = vmatpush1.bf16.msra.mxu0 0
        %255 = vmatprep.subr.bf16.mxu0 0
        %256 = vmatpush1.bf16.msra.mxu0 0
        %257 = vmatprep.subr.bf16.mxu0 0
        %258 = vmatpush1.bf16.msra.mxu0 0
        %259 = vmatprep.subr.bf16.mxu0 0
        %260 = vmatpush1.bf16.msra.mxu0 0
        %261 = vmatprep.mubr.bf16.mxu0 0
        %262 = vmatmul.mubr.bf16.gmra.mrb[0].mxu0 %v224
        %v263 = vpop.f32.mrb[0].mxu0
        %v264 = vadd.f32 %v208, %v263
        %v265 = vpop.f32.mrb[0].mxu0
        %v266 = vpop.f32.mrb[0].mxu0
        %v267 = vadd.f32 %v208, %v266
        %v268 = vpop.f32.mrb[0].mxu0
        %269 = vmatprep.mubr.bf16.mxu0 0
        %270 = vmatmul.mubr.bf16.gmra.mrb[0].mxu0 %v227
        %v271 = vpop.f32.mrb[0].mxu0
        %v272 = vadd.f32 %v208, %v271
        %v273 = vpop.f32.mrb[0].mxu0
        %v274 = vpop.f32.mrb[0].mxu0
        %v275 = vadd.f32 %v208, %v274
        %v276 = vpop.f32.mrb[0].mxu0
        %277 = vdwg.mxu0
        %v278 = vxor.u32 %v264, 2147483648
        %v279 = vxor.u32 %v267, 2147483648
        %v280 = vxor.u32 %v272, 2147483648
        %v281 = vxor.u32 %v275, 2147483648
        %v282 = vmul.f32 %v278, 1.442695
        %v283 = vpow.pop %v282
        %v284 = vmul.f32 %v279, 1.442695
        %v285 = vpow.pop %v284
        %v286 = vmul.f32 %v280, 1.442695
        %v287 = vpow.pop %v286
        %v288 = vmul.f32 %v281, 1.442695
        %v289 = vpow.pop %v288
        %v290 = vadd.f32 %v283, 1.0
        %v291 = vadd.f32 %v285, 1.0
        %v292 = vadd.f32 %v287, 1.0
        %v293 = vadd.f32 %v289, 1.0
        %v294 = vrcp.pop %v290
        %v295 = vmul.f32 1.0, %v294
        %v296 = vrcp.pop %v291
        %v297 = vmul.f32 1.0, %v296
        %v298 = vrcp.pop %v292
        %v299 = vmul.f32 1.0, %v298
        %v300 = vrcp.pop %v293
        %v301 = vmul.f32 1.0, %v300
        %vm302 = vcmask 130048
        %303 = vst.msk [vmem:[%s172] sm:$0xff] %vm302, %v295
        %304 = vst.msk [vmem:[%s172 + $0x8] sm:$0xff] %vm302, %v297
        %305 = vst.msk [vmem:[%s172 + $0x10] sm:$0xff] %vm302, %v299
        %306 = vst.msk [vmem:[%s172 + $0x18] sm:$0xff] %vm302, %v301
        %s307 = sand.u32 %s90, 1
        %s308 = sand.u32 %s90, 1
        %s309 = smul.addr %s308, 32
        %s310 = scalar_lea.vmem [#allocation2], %s309
        // Predicated region
        $region33: #{tpu_custom_call.1} parent=31 // pred_check
          %p311 = pneg %p100
        $region34: #{tpu_custom_call.1} parent=31 // pred_check_branch
          %313 = sbr.rel (%p311) target = $region36
        $region35: #{tpu_custom_call.1} parent=31 // pred_region
          %s314 = smul.u32 4, %s14
          %s315 = ssub.s32 13, %s314
          %p316 = scmp.lt.s32.totalorder %s315, 4
          %s317 = scalar_select %p316, %s315, 4
          %s318 = smul.u32 128, %s317
          %p319 = scmp.ne.s32.totalorder 0, %s318
          %s320 = smul.addr %s314, 8
          %s321 = scalar_lea.vmem %s3, %s320
          // Predicated region
          $region37: #{tpu_custom_call.1} parent=35 // pred_check
            %p322 = pneg %p319
          $region38: #{tpu_custom_call.1} parent=35 // pred_check_branch
            %324 = sbr.rel (%p322) target = $region40
          $region39: #{tpu_custom_call.1} parent=35 // pred_region
            // Predicated region
            $region41: #{tpu_custom_call.1} parent=39 // pred_check
              _
            $region42: #{tpu_custom_call.1} parent=39 // pred_check_branch
              %326 = sbr.rel (0) target = $region44
            $region43: #{tpu_custom_call.1} parent=39 // pred_region
              // Predicated region
              $region63: #{tpu_custom_call.1} parent=43 // pred_check
                _
              $region64: #{tpu_custom_call.1} parent=43 // pred_check_branch
                %381 = sbr.rel (0) target = $region66
              $region65: #{tpu_custom_call.1} parent=43 // pred_region
                %s382 = sshrl.u32 %s317, 2
                // While loop
                $region67: #{tpu_custom_call.1} parent=65 // loop_pre_header
                  _
                $region68: #{tpu_custom_call.1} parent=65 // loop_header
                  %s384 = sphi 0, %s386
                  %p385 = scmp.ge.s32.totalorder %s384, %s382
                  %s389 = sphi 0, %s402
                  %s390 = sphi %s310, %s405
                  %s391 = sphi %s321, %s406
                $region69: #{tpu_custom_call.1} parent=65 // loop_header_branch
                  %388 = sbr.rel (%p385) target = $region73
                $region70: #{tpu_custom_call.1} parent=65 // loop_body
                  %v392 = vld [vmem:[%s390] sm:$0xff]
                  %393 = vst [vmem:[%s391] sm:$0xff] %v392
                  %v394 = vld [vmem:[%s390 + $0x8] sm:$0xff]
                  %395 = vst [vmem:[%s391 + $0x8] sm:$0xff] %v394
                  %v396 = vld [vmem:[%s390 + $0x10] sm:$0xff]
                  %397 = vst [vmem:[%s391 + $0x10] sm:$0xff] %v396
                  %v398 = vld [vmem:[%s390 + $0x18] sm:$0xff]
                  %399 = vst [vmem:[%s391 + $0x18] sm:$0xff] %v398
                  %s400 = sadd.s32 1, %s389
                  %p401 = scmp.ge.s32.totalorder %s400, %s382
                  %s402 = scalar_select %p401, 0, %s400
                  %s403 = smul.u32 %s402, 32
                  %s404 = smul.u32 %s402, 32
                  %s405 = scalar_lea.vmem %s310, %s403 [#allocation2]
                  %s406 = scalar_lea.vmem %s321, %s404
                $region71: #{tpu_custom_call.1} parent=65 // loop_footer
                  %s386 = sadd.s32 %s384, 1
                $region72: #{tpu_custom_call.1} parent=65 // loop_footer_branch
                  %383 = sbr.rel target = $region68
                $region73: #{tpu_custom_call.1} parent=65 // loop_exit
                  _
                %s407 = sshrl.u32 %s317, 2
                %s408 = sand.u32 %s317, 3
                %s409 = smul.u32 %s407, 4
                %s410 = smul.u32 8, %s409
                %s411 = scalar_lea.vmem %s310, %s410 [#allocation2]
                %s412 = smul.u32 8, %s409
                %s413 = scalar_lea.vmem %s321, %s412
                // While loop
                $region74: #{tpu_custom_call.1} parent=65 // loop_pre_header
                  _
                $region75: #{tpu_custom_call.1} parent=65 // loop_header
                  %s415 = sphi 0, %s417
                  %p416 = scmp.ge.s32.totalorder %s415, %s408
                  %s420 = sphi 0, %s427
                  %s421 = sphi %s411, %s430
                  %s422 = sphi %s413, %s431
                $region76: #{tpu_custom_call.1} parent=65 // loop_header_branch
                  %419 = sbr.rel (%p416) target = $region80
                $region77: #{tpu_custom_call.1} parent=65 // loop_body
                  %v423 = vld [vmem:[%s421] sm:$0xff]
                  %424 = vst [vmem:[%s422] sm:$0xff] %v423
                  %s425 = sadd.s32 1, %s420
                  %p426 = scmp.ge.s32.totalorder %s425, %s408
                  %s427 = scalar_select %p426, 0, %s425
                  %s428 = smul.u32 %s427, 8
                  %s429 = smul.u32 %s427, 8
                  %s430 = scalar_lea.vmem %s411, %s428 [#allocation2]
                  %s431 = scalar_lea.vmem %s413, %s429
                $region78: #{tpu_custom_call.1} parent=65 // loop_footer
                  %s417 = sadd.s32 %s415, 1
                $region79: #{tpu_custom_call.1} parent=65 // loop_footer_branch
                  %414 = sbr.rel target = $region75
                $region80: #{tpu_custom_call.1} parent=65 // loop_exit
                  _
              $region66: #{tpu_custom_call.1} parent=43 // pred_fallthru
                _
              // Predicated region
              $region81: #{tpu_custom_call.1} parent=43 // pred_check
                _
              $region82: #{tpu_custom_call.1} parent=43 // pred_check_branch
                %433 = sbr.rel target = $region84
              $region83: #{tpu_custom_call.1} parent=43 // pred_region
                _
              $region84: #{tpu_custom_call.1} parent=43 // pred_fallthru
                _
            $region44: #{tpu_custom_call.1} parent=39 // pred_fallthru
              _
            // Predicated region
            $region45: #{tpu_custom_call.1} parent=39 // pred_check
              _
            $region46: #{tpu_custom_call.1} parent=39 // pred_check_branch
              %328 = sbr.rel target = $region48
            $region47: #{tpu_custom_call.1} parent=39 // pred_region
              %s330 = sshrl.u32 %s317, 2
              // While loop
              $region49: #{tpu_custom_call.1} parent=47 // loop_pre_header
                _
              $region50: #{tpu_custom_call.1} parent=47 // loop_header
                %s332 = sphi 0, %s334
                %p333 = scmp.ge.s32.totalorder %s332, %s330
                %s337 = sphi 0, %s350
                %s338 = sphi %s310, %s353
                %s339 = sphi %s321, %s354
              $region51: #{tpu_custom_call.1} parent=47 // loop_header_branch
                %336 = sbr.rel (%p333) target = $region55
              $region52: #{tpu_custom_call.1} parent=47 // loop_body
                %v340 = vld [vmem:[%s338] sm:$0xff]
                %341 = vst [vmem:[%s339] sm:$0xff] %v340
                %v342 = vld [vmem:[%s338 + $0x8] sm:$0xff]
                %343 = vst [vmem:[%s339 + $0x8] sm:$0xff] %v342
                %v344 = vld [vmem:[%s338 + $0x10] sm:$0xff]
                %345 = vst [vmem:[%s339 + $0x10] sm:$0xff] %v344
                %v346 = vld [vmem:[%s338 + $0x18] sm:$0xff]
                %347 = vst [vmem:[%s339 + $0x18] sm:$0xff] %v346
                %s348 = sadd.s32 1, %s337
                %p349 = scmp.ge.s32.totalorder %s348, %s330
                %s350 = scalar_select %p349, 0, %s348
                %s351 = smul.u32 %s350, 32
                %s352 = smul.u32 %s350, 32
                %s353 = scalar_lea.vmem %s310, %s351 [#allocation2]
                %s354 = scalar_lea.vmem %s321, %s352
              $region53: #{tpu_custom_call.1} parent=47 // loop_footer
                %s334 = sadd.s32 %s332, 1
              $region54: #{tpu_custom_call.1} parent=47 // loop_footer_branch
                %331 = sbr.rel target = $region50
              $region55: #{tpu_custom_call.1} parent=47 // loop_exit
                _
              %s355 = sshrl.u32 %s317, 2
              %s356 = sand.u32 %s317, 3
              %s357 = smul.u32 %s355, 4
              %s358 = smul.u32 8, %s357
              %s359 = scalar_lea.vmem %s310, %s358 [#allocation2]
              %s360 = smul.u32 8, %s357
              %s361 = scalar_lea.vmem %s321, %s360
              // While loop
              $region56: #{tpu_custom_call.1} parent=47 // loop_pre_header
                _
              $region57: #{tpu_custom_call.1} parent=47 // loop_header
                %s363 = sphi 0, %s365
                %p364 = scmp.ge.s32.totalorder %s363, %s356
                %s368 = sphi 0, %s375
                %s369 = sphi %s359, %s378
                %s370 = sphi %s361, %s379
              $region58: #{tpu_custom_call.1} parent=47 // loop_header_branch
                %367 = sbr.rel (%p364) target = $region62
              $region59: #{tpu_custom_call.1} parent=47 // loop_body
                %v371 = vld [vmem:[%s369] sm:$0xff]
                %372 = vst [vmem:[%s370] sm:$0xff] %v371
                %s373 = sadd.s32 1, %s368
                %p374 = scmp.ge.s32.totalorder %s373, %s356
                %s375 = scalar_select %p374, 0, %s373
                %s376 = smul.u32 %s375, 8
                %s377 = smul.u32 %s375, 8
                %s378 = scalar_lea.vmem %s359, %s376 [#allocation2]
                %s379 = scalar_lea.vmem %s361, %s377
              $region60: #{tpu_custom_call.1} parent=47 // loop_footer
                %s365 = sadd.s32 %s363, 1
              $region61: #{tpu_custom_call.1} parent=47 // loop_footer_branch
                %362 = sbr.rel target = $region57
              $region62: #{tpu_custom_call.1} parent=47 // loop_exit
                _
            $region48: #{tpu_custom_call.1} parent=39 // pred_fallthru
              _
          $region40: #{tpu_custom_call.1} parent=35 // pred_fallthru
            _
          %434 = vnop
        $region36: #{tpu_custom_call.1} parent=31 // pred_fallthru
          _
      $region32: #{tpu_custom_call.1} parent=5 // pred_fallthru
        _
      %p435 = scmp.le.s32.totalorder 2, %s9
      // Predicated region
      $region85: #{tpu_custom_call.1} parent=5 // pred_check
        %p436 = pneg %p435
      $region86: #{tpu_custom_call.1} parent=5 // pred_check_branch
        %438 = sbr.rel (%p436) target = $region88
      $region87: #{tpu_custom_call.1} parent=5 // pred_region
        %s439 = ssub.s32 %s9, 2
        // Predicated region
        $region89: #{tpu_custom_call.1} parent=87 // pred_check
          %p440 = pneg %p106
        $region90: #{tpu_custom_call.1} parent=87 // pred_check_branch
          %442 = sbr.rel (%p440) target = $region92
        $region91: #{tpu_custom_call.1} parent=87 // pred_region
          %s443 = sand.u32 %s91, 1
          %s444 = sand.u32 %s91, 1
          %s445 = smul.addr %s444, 32
          %s446 = scalar_lea.vmem [#allocation2], %s445
        $region92: #{tpu_custom_call.1} parent=87 // pred_fallthru
          _
      $region88: #{tpu_custom_call.1} parent=5 // pred_fallthru
        _
    $region6: #{tpu_custom_call.1} parent=1 // loop_footer
      %s13 = sadd.s32 1, %s9
    $region7: #{tpu_custom_call.1} parent=1 // loop_footer_branch
      %8 = sbr.rel target = $region3
    $region8: #{tpu_custom_call.1} parent=1 // loop_exit
      _

</llo_original>
